<compile_context>
chip_gen: v6e
topology: v6e:2x2x1
jax: 0.10.0
libtpu: 0.0.40
codegen_flags: <defaults>
</compile_context>

<pallas_src>
import functools

import jax
import jax.numpy as jnp
from jax import lax
from jax.experimental import pallas as pl
from jax.experimental.pallas import tpu as pltpu


def _round_up(v, m):
    return ((v + m - 1) // m) * m


def _vmem_limit_bytes():
    """Generation-aware scoped-VMEM limit (leave headroom below physical)."""
    try:
        kind = jax.devices()[0].device_kind.lower()
    except Exception:
        kind = ""
    if ("v4" in kind) or ("v5" in kind) or ("v6" in kind):
        return 100 * 1024 * 1024      # 128 MiB physical
    return 48 * 1024 * 1024           # v7x: 64 MiB per TensorCore / unknown: safe


def _default_block_b(B, n_pad, target_rows=512):
    """Largest divisor of B with block_b * N_pad <= target_rows."""
    bt = 1
    for cand in range(1, B + 1):
        if B % cand == 0 and cand * n_pad <= target_rows:
            bt = cand
    return bt


def _default_block_q(n_pad, target=512):
    """Query-tile size: full N when small, else largest divisor <= target (mult of 8)."""
    if n_pad <= target:
        return n_pad
    best = 8
    for cand in range(8, target + 1, 8):
        if n_pad % cand == 0:
            best = cand
    return best


def _self_attention_kernel(x_ref,       # (bt, Np, C)      VMEM, compute_dtype
                           vlen_ref,    # (bt, 1, 1)       VMEM, int32
                           wq_ref,      # (C, Dp)          VMEM, compute_dtype
                           bq_ref,      # (1, Dp)          VMEM, f32
                           wkv_ref,     # (C, Dp + D)      VMEM, compute_dtype
                           bkv_ref,     # (1, Dp + D)      VMEM, f32
                           o_ref,       # (bt, tq, D)      VMEM, f32
                           k_sc,        # (bt, Np, Dp)     VMEM scratch, compute_dtype
                           v_sc,        # (bt, Np, D)      VMEM scratch, compute_dtype
                           *, compute_dtype):
    bt, n_pad, c = x_ref.shape
    tq = o_ref.shape[1]
    d = o_ref.shape[-1]
    dp = wq_ref.shape[-1]
    qi = pl.program_id(1)

    # K/V projection once per batch block (q-tile axis is innermost, scratch
    # persists across grid steps).  Fused (C, Dp+D) weight -> one MXU push;
    # slices at lane offsets 0 and Dp (both 128-aligned).
    @pl.when(qi == 0)
    def _():
        xkv = x_ref[...].reshape(bt * n_pad, c)
        kv = jnp.dot(xkv, wkv_ref[...], preferred_element_type=jnp.float32)
        kv = kv + bkv_ref[...]                                  # f32
        k_sc[...] = kv[:, :dp].reshape(bt, n_pad, dp).astype(k_sc.dtype)
        v_sc[...] = kv[:, dp:].reshape(bt, n_pad, d).astype(v_sc.dtype)

    # Q projection for this query tile; rows sliced from the resident x block.
    row0 = pl.multiple_of(qi * tq, 8)
    xq = x_ref[:, pl.ds(row0, tq), :].reshape(bt * tq, c)
    q = jnp.dot(xq, wq_ref[...], preferred_element_type=jnp.float32) + bq_ref[...]
    q = q.reshape(bt, tq, dp).astype(compute_dtype)

    # scores = q @ k^T, batched over bt; contraction dims avoid an explicit transpose.
    scores = lax.dot_general(
        q, k_sc[...],
        dimension_numbers=(((2,), (2,)), ((0,), (0,))),
        preferred_element_type=jnp.float32)                     # (bt, tq, Np)

    # masked_softmax: key columns >= valid_len[b] set to -1e6.  Iota stays
    # (1, 1, Np); the compare/select broadcast instead of materializing N^2 int32.
    col = lax.broadcasted_iota(jnp.int32, (1, 1, n_pad), 2)
    scores = jnp.where(col >= vlen_ref[...], jnp.float32(-1000000.0), scores)

    m = jnp.max(scores, axis=-1, keepdims=True)
    e = jnp.exp(scores - m)
    denom = jnp.sum(e, axis=-1, keepdims=True)                  # (bt, tq, 1)

    out = lax.dot_general(
        e.astype(compute_dtype), v_sc[...],
        dimension_numbers=(((2,), (1,)), ((0,), (0,))),
        preferred_element_type=jnp.float32)                     # (bt, tq, D)
    # Normalize the small (tq, D) output instead of the (tq, Np) weights.
    o_ref[...] = (out * pl.reciprocal(denom)).astype(o_ref.dtype)


def self_attention(x, valid_len, wq, bq, wk, bk, wv, bv,
                   *, block_b=None, block_q=None, compute_dtype=jnp.bfloat16):
    """x: (B, N, C) f32, valid_len: (B,) int, weights (C, D), biases (1, D).

    Returns (B, N, D) float32.  compute_dtype controls MXU input precision
    (bfloat16 by default; softmax math and accumulation remain float32)."""
    B, N, C = x.shape
    D = wq.shape[1]
    Dp = _round_up(D, 128)       # lane-aligned q/k head columns (zero padded)
    Np = _round_up(N, 8)         # sublane-aligned token rows

    # Pad token rows: padded KEY rows have index >= N >= valid_len -> masked out;
    # padded QUERY rows are sliced off below.
    if Np != N:
        x = jnp.pad(x, ((0, 0), (0, Np - N), (0, 0)))

    pad_qk = ((0, 0), (0, Dp - D))
    w_q = jnp.pad(wq, pad_qk).astype(compute_dtype)                       # (C, Dp)
    b_q = jnp.pad(bq, pad_qk).astype(jnp.float32)                         # (1, Dp)
    w_kv = jnp.concatenate([jnp.pad(wk, pad_qk), wv], axis=1).astype(compute_dtype)  # (C, Dp+D)
    b_kv = jnp.concatenate([jnp.pad(bk, pad_qk), bv], axis=1).astype(jnp.float32)    # (1, Dp+D)
    x_in = x.astype(compute_dtype)

    bt = block_b if block_b is not None else _default_block_b(B, Np)
    assert B % bt == 0, "block_b must divide the batch size"
    tq = block_q if block_q is not None else _default_block_q(Np)
    assert Np % tq == 0 and tq % 8 == 0, "block_q must divide padded N and be a multiple of 8"

    vlen3 = valid_len.astype(jnp.int32).reshape(B, 1, 1)

    grid = (B // bt, Np // tq)

    grid_spec = pltpu.PrefetchScalarGridSpec(
        num_scalar_prefetch=0,
        grid=grid,
        in_specs=[
            # x block index is constant along the q-tile axis -> DMA'd once per
            # batch block; query rows are sliced from it inside the kernel.
            pl.BlockSpec((bt, Np, C), lambda i, j: (i, 0, 0)),      # x
            pl.BlockSpec((bt, 1, 1), lambda i, j: (i, 0, 0)),       # valid_len
            pl.BlockSpec((C, Dp), lambda i, j: (0, 0)),             # Wq (padded)
            pl.BlockSpec((1, Dp), lambda i, j: (0, 0)),             # bq
            pl.BlockSpec((C, Dp + D), lambda i, j: (0, 0)),         # fused Wk|Wv
            pl.BlockSpec((1, Dp + D), lambda i, j: (0, 0)),         # fused bk|bv
        ],
        # Lane width = D = full array extent: direct (B, N, D) store, no padded
        # output round trip.
        out_specs=pl.BlockSpec((bt, tq, D), lambda i, j: (i, j, 0)),
        scratch_shapes=[
            pltpu.VMEM((bt, Np, Dp), compute_dtype),   # K (persists across q tiles)
            pltpu.VMEM((bt, Np, D), compute_dtype),    # V
        ],
    )

    out = pl.pallas_call(
        functools.partial(_self_attention_kernel, compute_dtype=compute_dtype),
        out_shape=jax.ShapeDtypeStruct((B, Np, D), jnp.float32),
        grid_spec=grid_spec,
        compiler_params=pltpu.CompilerParams(
            dimension_semantics=("parallel", "arbitrary"),
            vmem_limit_bytes=_vmem_limit_bytes()),
    )(x_in, vlen3, w_q, b_q, w_kv, b_kv)

    return out[:, :N, :] if Np != N else out


def _reference(x, valid_len, wq, bq, wk, bk, wv, bv):
    q = jnp.einsum("bnc,cd->bnd", x, wq) + bq
    k = jnp.einsum("bnc,cd->bnd", x, wk) + bk
    v = jnp.einsum("bnc,cd->bnd", x, wv) + bv
    scores = jnp.einsum("bqd,bkd->bqk", q, k)
    col = jnp.arange(scores.shape[-1])[None, None, :]
    scores = jnp.where(col >= valid_len[:, None, None], -1000000.0, scores)
    attn = jax.nn.softmax(scores, axis=-1)
    return jnp.einsum("bqk,bkd->bqd", attn, v)


if __name__ == "__main__":
    # Small shapes consistent with the module: batch=2, tokens=8,
    # in_channels=16, global_graph_width=32.
    B, N, C, D = 2, 8, 16, 32

    key = jax.random.PRNGKey(0)
    kx, kq, kbq, kk, kbk, kv, kbv = jax.random.split(key, 7)

    x = jax.random.normal(kx, (B, N, C), dtype=jnp.float32)
    valid_len = jnp.array([5, 8], dtype=jnp.int32)

    # Deterministic parameter init (Linear: weight (D, C) stored transposed as (C, D)).
    scale = 1.0 / jnp.sqrt(jnp.float32(C))
    wq = jax.random.uniform(kq, (C, D), jnp.float32, -scale, scale)
    bq = jax.random.uniform(kbq, (1, D), jnp.float32, -scale, scale)
    wk = jax.random.uniform(kk, (C, D), jnp.float32, -scale, scale)
    bk = jax.random.uniform(kbk, (1, D), jnp.float32, -scale, scale)
    wv = jax.random.uniform(kv, (C, D), jnp.float32, -scale, scale)
    bv = jax.random.uniform(kbv, (1, D), jnp.float32, -scale, scale)

    ref = _reference(x, valid_len, wq, bq, wk, bk, wv, bv)

    # Default path: bfloat16 MXU inputs (f32 softmax / accumulation). Looser
    # tolerance reflects bf16 input rounding; still catches structural errors.
    out_bf16 = self_attention(x, valid_len, wq, bq, wk, bk, wv, bv)
    out_bf16 = jax.block_until_ready(out_bf16)
    assert out_bf16.shape == (B, N, D)
    assert jnp.allclose(out_bf16, ref, atol=3e-2, rtol=3e-2), "bf16 path mismatch vs reference"

    # Full float32 path: tight tolerance parity check.
    out_f32 = self_attention(x, valid_len, wq, bq, wk, bk, wv, bv,
                             compute_dtype=jnp.float32)
    out_f32 = jax.block_until_ready(out_f32)
    assert jnp.allclose(out_f32, ref, atol=1e-2, rtol=1e-2), "f32 path mismatch vs reference"

    print("KERNEL_OK")
</pallas_src>

<mosaic_0001>
module attributes {stable_mosaic.version = 11 : i64} {
  func.func @_self_attention_kernel(%arg0: i32, %arg1: i32, %arg2: memref<2x8x16xbf16, #tpu.memory_space<vmem>>, %arg3: memref<2x1x1xi32, #tpu.memory_space<vmem>>, %arg4: memref<16x128xbf16, #tpu.memory_space<vmem>>, %arg5: memref<1x128xf32, #tpu.memory_space<vmem>>, %arg6: memref<16x160xbf16, #tpu.memory_space<vmem>>, %arg7: memref<1x160xf32, #tpu.memory_space<vmem>>, %arg8: memref<2x8x32xf32, #tpu.memory_space<vmem>>, %arg9: memref<2x8x128xbf16, #tpu.memory_space<vmem>>, %arg10: memref<2x8x32xbf16, #tpu.memory_space<vmem>>) attributes {dimension_semantics = [#tpu.dimension_semantics<parallel>, #tpu.dimension_semantics<arbitrary>], iteration_bounds = array<i64: 1, 1>, scalar_prefetch = 0 : i64, scratch_operands = 2 : i64, tpu.core_type = #tpu.core_type<tc>, window_params = [{transform_indices = @transform_0, window_bounds = array<i64: 2, 8, 16>}, {transform_indices = @transform_1, window_bounds = array<i64: 2, 1, 1>}, {pipeline_mode = #tpu.pipeline_mode<synchronous>, transform_indices = @transform_2, window_bounds = array<i64: 16, 128>}, {pipeline_mode = #tpu.pipeline_mode<synchronous>, transform_indices = @transform_3, window_bounds = array<i64: 1, 128>}, {pipeline_mode = #tpu.pipeline_mode<synchronous>, transform_indices = @transform_4, window_bounds = array<i64: 16, 160>}, {pipeline_mode = #tpu.pipeline_mode<synchronous>, transform_indices = @transform_5, window_bounds = array<i64: 1, 160>}, {transform_indices = @transform_6, window_bounds = array<i64: 2, 8, 32>}]} {
    %c0_i32 = arith.constant 0 : i32
    %0 = arith.cmpi eq, %arg1, %c0_i32 : i32
    %1 = arith.extui %0 : i1 to i32
    %c0_i32_0 = arith.constant 0 : i32
    %2 = arith.cmpi ne, %1, %c0_i32_0 : i32
    scf.if %2 {
      %c0_23 = arith.constant 0 : index
      %c0_24 = arith.constant 0 : index
      %c0_25 = arith.constant 0 : index
      %40 = vector.load %arg2[%c0_23, %c0_24, %c0_25] : memref<2x8x16xbf16, #tpu.memory_space<vmem>>, vector<2x8x16xbf16>
      %41 = vector.shape_cast %40 : vector<2x8x16xbf16> to vector<16x16xbf16>
      %c0_26 = arith.constant 0 : index
      %c0_27 = arith.constant 0 : index
      %42 = vector.load %arg6[%c0_26, %c0_27] : memref<16x160xbf16, #tpu.memory_space<vmem>>, vector<16x160xbf16>
      %cst_28 = arith.constant dense<0.000000e+00> : vector<16x160xf32>
      %43 = tpu.matmul %41, %42, %cst_28 {dimension_numbers = #tpu.dot_dimension_numbers<[1], [0], [0], [1], [0, 0, 1, 1], [], []>} : vector<16x16xbf16>, vector<16x160xbf16>, vector<16x160xf32> -> vector<16x160xf32>
      %c0_29 = arith.constant 0 : index
      %c0_30 = arith.constant 0 : index
      %44 = vector.load %arg7[%c0_29, %c0_30] : memref<1x160xf32, #tpu.memory_space<vmem>>, vector<1x160xf32>
      %45 = vector.broadcast %44 : vector<1x160xf32> to vector<16x160xf32>
      %46 = arith.addf %43, %45 : vector<16x160xf32>
      %47 = vector.extract_strided_slice %46 {offsets = [0, 0], sizes = [16, 128], strides = [1, 1]} : vector<16x160xf32> to vector<16x128xf32>
      %48 = vector.shape_cast %47 : vector<16x128xf32> to vector<2x8x128xf32>
      %49 = arith.truncf %48 : vector<2x8x128xf32> to vector<2x8x128xbf16>
      %c0_31 = arith.constant 0 : index
      %c0_32 = arith.constant 0 : index
      %c0_33 = arith.constant 0 : index
      %50 = vector.load %arg9[%c0_31, %c0_32, %c0_33] : memref<2x8x128xbf16, #tpu.memory_space<vmem>>, vector<2x8x128xbf16>
      tpu.vector_store %arg9[%c0_31, %c0_32, %c0_33], %49 {strides = array<i32>} : memref<2x8x128xbf16, #tpu.memory_space<vmem>>, vector<2x8x128xbf16>,
      %51 = vector.extract_strided_slice %46 {offsets = [0, 128], sizes = [16, 32], strides = [1, 1]} : vector<16x160xf32> to vector<16x32xf32>
      %52 = vector.shape_cast %51 : vector<16x32xf32> to vector<2x8x32xf32>
      %53 = arith.truncf %52 : vector<2x8x32xf32> to vector<2x8x32xbf16>
      %c0_34 = arith.constant 0 : index
      %c0_35 = arith.constant 0 : index
      %c0_36 = arith.constant 0 : index
      %54 = vector.load %arg10[%c0_34, %c0_35, %c0_36] : memref<2x8x32xbf16, #tpu.memory_space<vmem>>, vector<2x8x32xbf16>
      tpu.vector_store %arg10[%c0_34, %c0_35, %c0_36], %53 {strides = array<i32>} : memref<2x8x32xbf16, #tpu.memory_space<vmem>>, vector<2x8x32xbf16>,
    } else {
    }
    %c8_i32 = arith.constant 8 : i32
    %3 = arith.muli %arg1, %c8_i32 : i32
    %4 = tpu.assume_multiple %3, 8 : i32
    %c0 = arith.constant 0 : index
    %5 = arith.index_cast %4 : i32 to index
    %c0_1 = arith.constant 0 : index
    %6 = vector.load %arg2[%c0, %5, %c0_1] : memref<2x8x16xbf16, #tpu.memory_space<vmem>>, vector<2x8x16xbf16>
    %7 = vector.shape_cast %6 : vector<2x8x16xbf16> to vector<16x16xbf16>
    %c0_2 = arith.constant 0 : index
    %c0_3 = arith.constant 0 : index
    %8 = vector.load %arg4[%c0_2, %c0_3] : memref<16x128xbf16, #tpu.memory_space<vmem>>, vector<16x128xbf16>
    %cst = arith.constant dense<0.000000e+00> : vector<16x128xf32>
    %9 = tpu.matmul %7, %8, %cst {dimension_numbers = #tpu.dot_dimension_numbers<[1], [0], [0], [1], [0, 0, 1, 1], [], []>} : vector<16x16xbf16>, vector<16x128xbf16>, vector<16x128xf32> -> vector<16x128xf32>
    %c0_4 = arith.constant 0 : index
    %c0_5 = arith.constant 0 : index
    %10 = vector.load %arg5[%c0_4, %c0_5] : memref<1x128xf32, #tpu.memory_space<vmem>>, vector<1x128xf32>
    %11 = vector.broadcast %10 : vector<1x128xf32> to vector<16x128xf32>
    %12 = arith.addf %9, %11 : vector<16x128xf32>
    %13 = vector.shape_cast %12 : vector<16x128xf32> to vector<2x8x128xf32>
    %14 = arith.truncf %13 : vector<2x8x128xf32> to vector<2x8x128xbf16>
    %c0_6 = arith.constant 0 : index
    %c0_7 = arith.constant 0 : index
    %c0_8 = arith.constant 0 : index
    %15 = vector.load %arg9[%c0_6, %c0_7, %c0_8] : memref<2x8x128xbf16, #tpu.memory_space<vmem>>, vector<2x8x128xbf16>
    %cst_9 = arith.constant dense<0.000000e+00> : vector<2x8x8xf32>
    %16 = tpu.matmul %14, %15, %cst_9 {dimension_numbers = #tpu.dot_dimension_numbers<[2], [2], [1], [1], [0, 0, 0, 1, 1, 1], [0], [0]>} : vector<2x8x128xbf16>, vector<2x8x128xbf16>, vector<2x8x8xf32> -> vector<2x8x8xf32>
    %17 = tpu.iota {dimensions = array<i32: 2>} : vector<1x1x8xi32>
    %c0_10 = arith.constant 0 : index
    %c0_11 = arith.constant 0 : index
    %c0_12 = arith.constant 0 : index
    %18 = vector.load %arg3[%c0_10, %c0_11, %c0_12] : memref<2x1x1xi32, #tpu.memory_space<vmem>>, vector<2x1x1xi32>
    %19 = vector.broadcast %17 : vector<1x1x8xi32> to vector<2x1x8xi32>
    %20 = vector.broadcast %18 : vector<2x1x1xi32> to vector<2x1x8xi32>
    %21 = arith.cmpi sge, %19, %20 : vector<2x1x8xi32>
    %cst_13 = arith.constant -1.000000e+06 : f32
    %22 = vector.shape_cast %21 : vector<2x1x8xi1> to vector<2x1x8xi1>
    %23 = vector.broadcast %22 : vector<2x1x8xi1> to vector<2x8x8xi1>
    %24 = vector.broadcast %cst_13 : f32 to vector<2x8x8xf32>
    %25 = arith.select %23, %24, %16 : vector<2x8x8xi1>, vector<2x8x8xf32>
    %cst_14 = arith.constant dense<0xFF800000> : vector<2x8xf32>
    %26 = vector.multi_reduction <maximumf>, %25, %cst_14 [2] : vector<2x8x8xf32> to vector<2x8xf32>
    %27 = vector.shape_cast %26 : vector<2x8xf32> to vector<2x8x1xf32>
    %28 = vector.broadcast %27 : vector<2x8x1xf32> to vector<2x8x8xf32>
    %29 = arith.subf %25, %28 : vector<2x8x8xf32>
    %30 = math.exp %29 : vector<2x8x8xf32>
    %cst_15 = arith.constant dense<0.000000e+00> : vector<2x8xf32>
    %31 = vector.multi_reduction <add>, %30, %cst_15 [2] : vector<2x8x8xf32> to vector<2x8xf32>
    %32 = vector.shape_cast %31 : vector<2x8xf32> to vector<2x8x1xf32>
    %33 = arith.truncf %30 : vector<2x8x8xf32> to vector<2x8x8xbf16>
    %c0_16 = arith.constant 0 : index
    %c0_17 = arith.constant 0 : index
    %c0_18 = arith.constant 0 : index
    %34 = vector.load %arg10[%c0_16, %c0_17, %c0_18] : memref<2x8x32xbf16, #tpu.memory_space<vmem>>, vector<2x8x32xbf16>
    %cst_19 = arith.constant dense<0.000000e+00> : vector<2x8x32xf32>
    %35 = tpu.matmul %33, %34, %cst_19 {dimension_numbers = #tpu.dot_dimension_numbers<[2], [1], [1], [2], [0, 0, 0, 1, 1, 2], [0], [0]>} : vector<2x8x8xbf16>, vector<2x8x32xbf16>, vector<2x8x32xf32> -> vector<2x8x32xf32>
    %36 = tpu.reciprocal %32 : vector<2x8x1xf32> -> vector<2x8x1xf32>
    %37 = vector.broadcast %36 : vector<2x8x1xf32> to vector<2x8x32xf32>
    %38 = arith.mulf %35, %37 : vector<2x8x32xf32>
    %c0_20 = arith.constant 0 : index
    %c0_21 = arith.constant 0 : index
    %c0_22 = arith.constant 0 : index
    %39 = vector.load %arg8[%c0_20, %c0_21, %c0_22] : memref<2x8x32xf32, #tpu.memory_space<vmem>>, vector<2x8x32xf32>
    tpu.vector_store %arg8[%c0_20, %c0_21, %c0_22], %38 {strides = array<i32>} : memref<2x8x32xf32, #tpu.memory_space<vmem>>, vector<2x8x32xf32>,
    return
  }
  func.func @transform_0(%arg0: i32, %arg1: i32) -> (i32, i32, i32) {
    %c0_i32 = arith.constant 0 : i32
    %c0_i32_0 = arith.constant 0 : i32
    %c0_i32_1 = arith.constant 0 : i32
    return %arg0, %c0_i32, %c0_i32_0 : i32, i32, i32
  }
  func.func @transform_1(%arg0: i32, %arg1: i32) -> (i32, i32, i32) {
    %c0_i32 = arith.constant 0 : i32
    %c0_i32_0 = arith.constant 0 : i32
    %c0_i32_1 = arith.constant 0 : i32
    return %arg0, %c0_i32, %c0_i32_0 : i32, i32, i32
  }
  func.func @transform_2(%arg0: i32, %arg1: i32) -> (i32, i32) {
    %c0_i32 = arith.constant 0 : i32
    %c0_i32_0 = arith.constant 0 : i32
    %c0_i32_1 = arith.constant 0 : i32
    return %c0_i32, %c0_i32_0 : i32, i32
  }
  func.func @transform_3(%arg0: i32, %arg1: i32) -> (i32, i32) {
    %c0_i32 = arith.constant 0 : i32
    %c0_i32_0 = arith.constant 0 : i32
    %c0_i32_1 = arith.constant 0 : i32
    return %c0_i32, %c0_i32_0 : i32, i32
  }
  func.func @transform_4(%arg0: i32, %arg1: i32) -> (i32, i32) {
    %c0_i32 = arith.constant 0 : i32
    %c0_i32_0 = arith.constant 0 : i32
    %c0_i32_1 = arith.constant 0 : i32
    return %c0_i32, %c0_i32_0 : i32, i32
  }
  func.func @transform_5(%arg0: i32, %arg1: i32) -> (i32, i32) {
    %c0_i32 = arith.constant 0 : i32
    %c0_i32_0 = arith.constant 0 : i32
    %c0_i32_1 = arith.constant 0 : i32
    return %c0_i32, %c0_i32_0 : i32, i32
  }
  func.func @transform_6(%arg0: i32, %arg1: i32) -> (i32, i32, i32) {
    %c0_i32 = arith.constant 0 : i32
    %c0_i32_0 = arith.constant 0 : i32
    return %arg0, %arg1, %c0_i32 : i32, i32, i32
  }
}

</mosaic_0001>

<llo_original>
// kernel: tpu_custom_call.1
$region0: #{tpu_custom_call.1}
  #allocation0 [shape = 'u32[]', space=smem, size = 0x4, offset = 0x4, fixed_abs, tag = 'smem constant byte address 0x4 - core index']
  #allocation1 [shape = 'u32[144,128]{1,0:T(1,128)}', space=vmem, size = 0x12000, scoped, tag = 'internal scratch']
  #allocation2 [shape = 'bf16[2,8,128]{2,1,0:T(8,128)(2,1)}', space=vmem, size = 0x1000, scoped, tag = 'scratch operand']
  #allocation3 [shape = 'bf16[2,8,32]{2,1,0:T(8,128)(2,1)}', space=vmem, size = 0x1000, scoped, tag = 'scratch operand']
  %s0 = inlined_call_operand.hbm [shape: bf16[2,8,16], index: 0, kind: input, shape index: {}]
  %s1 = inlined_call_operand.vmem [shape: s32[2,1,1], index: 1, kind: input, shape index: {}]
  %s2 = inlined_call_operand.hbm [shape: bf16[16,128], index: 2, kind: input, shape index: {}]
  %s3 = inlined_call_operand.vmem [shape: f32[1,128], index: 3, kind: input, shape index: {}]
  %s4 = inlined_call_operand.hbm [shape: bf16[16,160], index: 4, kind: input, shape index: {}]
  %s5 = inlined_call_operand.vmem [shape: f32[1,160], index: 5, kind: input, shape index: {}]
  %s6 = inlined_call_operand.hbm [shape: f32[2,8,32], index: 6, kind: output, shape index: {}]
  %s7 = sld [smem:[#allocation0]]
  $region50: #{tpu_custom_call.1} parent=0
    _
  %s9 = ssub.s32 1, %s7
  %s10 = scalar_select 0, %s9, %s7
  $region1: #{tpu_custom_call.1} parent=0
    #allocation4 [shape = 'u8[4096]{0}', space=vmem, size = 0x1000, scoped, tag = 'input window, operand 0, single buffered']
    #allocation5 [shape = 's32[1]{0}', space=sflag, size = 0x4, scoped, tag = 'scoped memory for tpu_custom_call.1']
    #allocation6 [shape = 's32[1]{0}', space=sflag, size = 0x4, scoped, tag = 'scoped memory for tpu_custom_call.1']
    #allocation7 [shape = 'u8[4096]{0}', space=vmem, size = 0x1000, scoped, tag = 'input window, operand 2, single buffered']
    #allocation8 [shape = 's32[1]{0}', space=sflag, size = 0x4, scoped, tag = 'scoped memory for tpu_custom_call.1']
    #allocation9 [shape = 'u8[8192]{0}', space=vmem, size = 0x2000, scoped, tag = 'input window, operand 4, single buffered']
    #allocation10 [shape = 'u8[8192]{0}', space=vmem, size = 0x2000, scoped, tag = 'output window, operand 0, single buffered']
    %11 = vsyncpa [#allocation5], 0
    %12 = vsyncpa [#allocation8], 0
    %13 = vsyncpa [#allocation6], 0
    // Predicated region
    $region2: #{tpu_custom_call.1} parent=1 // pred_check
      _
    $region3: #{tpu_custom_call.1} parent=1 // pred_check_branch
      %15 = sbr.rel (0) target = $region5
    $region4: #{tpu_custom_call.1} parent=1 // pred_region
      %s17 = ssub.s32 128, 128
      %18 = vsyncadd [#allocation5], %s17
      %s19 = sshll.u32 [#allocation4], 4
      %s20 = int_to_ptr.vmem [resolvable:$true] %s19
      %25 = dma.hbm_to_vmem [thread:$0]  %s0, 128, %s20, [#allocation5], 64, 64, 4
    $region5: #{tpu_custom_call.1} parent=1 // pred_fallthru
      _
    // Predicated region
    $region6: #{tpu_custom_call.1} parent=1 // pred_check
      _
    $region7: #{tpu_custom_call.1} parent=1 // pred_check_branch
      %27 = sbr.rel (0) target = $region9
    $region8: #{tpu_custom_call.1} parent=1 // pred_region
      _
    $region9: #{tpu_custom_call.1} parent=1 // pred_fallthru
      _
    // Predicated region
    $region10: #{tpu_custom_call.1} parent=1 // pred_check
      _
    $region11: #{tpu_custom_call.1} parent=1 // pred_check_branch
      %29 = sbr.rel (0) target = $region13
    $region12: #{tpu_custom_call.1} parent=1 // pred_region
      %s31 = ssub.s32 128, 128
      %32 = vsyncadd [#allocation8], %s31
      %s33 = sshll.u32 [#allocation7], 4
      %s34 = int_to_ptr.vmem [resolvable:$true] %s33
      %39 = dma.hbm_to_vmem [thread:$0]  %s2, 128, %s34, [#allocation8], 64, 64, 4
    $region13: #{tpu_custom_call.1} parent=1 // pred_fallthru
      _
    // Predicated region
    $region14: #{tpu_custom_call.1} parent=1 // pred_check
      _
    $region15: #{tpu_custom_call.1} parent=1 // pred_check_branch
      %41 = sbr.rel (0) target = $region17
    $region16: #{tpu_custom_call.1} parent=1 // pred_region
      _
    $region17: #{tpu_custom_call.1} parent=1 // pred_fallthru
      _
    // Predicated region
    $region18: #{tpu_custom_call.1} parent=1 // pred_check
      _
    $region19: #{tpu_custom_call.1} parent=1 // pred_check_branch
      %43 = sbr.rel (0) target = $region21
    $region20: #{tpu_custom_call.1} parent=1 // pred_region
      %s45 = ssub.s32 256, 256
      %46 = vsyncadd [#allocation8], %s45
      %s47 = sshll.u32 [#allocation9], 4
      %s48 = int_to_ptr.vmem [resolvable:$true] %s47
      %53 = dma.hbm_to_vmem [thread:$0]  %s4, 256, %s48, [#allocation8], 128, 128, 8
    $region21: #{tpu_custom_call.1} parent=1 // pred_fallthru
      _
    // Predicated region
    $region22: #{tpu_custom_call.1} parent=1 // pred_check
      _
    $region23: #{tpu_custom_call.1} parent=1 // pred_check_branch
      %55 = sbr.rel (0) target = $region25
    $region24: #{tpu_custom_call.1} parent=1 // pred_region
      _
    $region25: #{tpu_custom_call.1} parent=1 // pred_fallthru
      _
    // Predicated region
    $region26: #{tpu_custom_call.1} parent=1 // pred_check
      _
    $region27: #{tpu_custom_call.1} parent=1 // pred_check_branch
      %57 = sbr.rel (0) target = $region29
    $region28: #{tpu_custom_call.1} parent=1 // pred_region
      %58 = dma.done [#allocation5], 128
    $region29: #{tpu_custom_call.1} parent=1 // pred_fallthru
      _
    // Predicated region
    $region30: #{tpu_custom_call.1} parent=1 // pred_check
      _
    $region31: #{tpu_custom_call.1} parent=1 // pred_check_branch
      %60 = sbr.rel (0) target = $region33
    $region32: #{tpu_custom_call.1} parent=1 // pred_region
      %61 = dma.done [#allocation8], 128
    $region33: #{tpu_custom_call.1} parent=1 // pred_fallthru
      _
    // Predicated region
    $region34: #{tpu_custom_call.1} parent=1 // pred_check
      _
    $region35: #{tpu_custom_call.1} parent=1 // pred_check_branch
      %63 = sbr.rel (0) target = $region37
    $region36: #{tpu_custom_call.1} parent=1 // pred_region
      %64 = dma.done [#allocation8], 256
    $region37: #{tpu_custom_call.1} parent=1 // pred_fallthru
      _
    %p66 = scmp.eq.s32.totalorder 0, 0
    // Predicated region
    $region38: #{tpu_custom_call.1} parent=1 // pred_check
      %p67 = pneg %p66
    $region39: #{tpu_custom_call.1} parent=1 // pred_check_branch
      %69 = sbr.rel (%p67) target = $region41
    $region40: #{tpu_custom_call.1} parent=1 // pred_region
      %v70 = vld [vmem:[#allocation4] sm:$0xf]
      %v71 = vld [vmem:[#allocation4 + $0x4] sm:$0xf]
      %v72 = vld [vmem:[#allocation9] sm:$0xff]
      %v73 = vld [vmem:[#allocation9 + $0x8] sm:$0xff]
      %v74 = vld [vmem:[%s5] sm:$0x3]
      %v76 = vlaneseq
      %v77 = vshrl.u32 %v76, 7
      %v78 = vsub.s32 0, %v77
      %v79 = vrot.slane %v74, %v78
      %v80 = vlaneseq
      %v81 = vshrl.u32 %v80, 7
      %v82 = vsub.s32 1, %v81
      %v83 = vrot.slane %v74, %v82
      %v88 = vunpack.c.l.b16 %v70
      %v89 = vunpack.c.l.b16 %v71
      %v90 = vpack.c.b16 %v89, %v88
      %v93 = vunpack.c.l.b16 %v72
      %v94 = vunpack.c.h.b16 %v72
      %v95 = vunpack.c.l.b16 %v73
      %v96 = vunpack.c.h.b16 %v73
      %v97 = vpack.c.b16 %v95, %v93
      %v98 = vpack.c.b16 %v96, %v94
      %vm101 = vcmask 130048
      %v103 = vsel %vm101, %v90, 0
      %105 = vmatprep.subr.bf16.mxu0 0
      %106 = vmatpush1.bf16.msra.mxu0 0
      %107 = vmatprep.subr.bf16.mxu0 0
      %108 = vmatpush1.bf16.msra.mxu0 0
      %109 = vmatprep.subr.bf16.mxu0 0
      %110 = vmatpush1.bf16.msra.mxu0 0
      %111 = vmatprep.subr.bf16.mxu0 0
      %112 = vmatpush1.bf16.msra.mxu0 0
      %113 = vmatprep.subr.bf16.mxu0 0
      %114 = vmatpush1.bf16.msra.mxu0 0
      %115 = vmatprep.subr.bf16.mxu0 0
      %116 = vmatpush1.bf16.msra.mxu0 0
      %117 = vmatprep.subr.bf16.mxu0 0
      %118 = vmatpush1.bf16.msra.mxu0 0
      %119 = vmatprep.subr.bf16.mxu0 %v98
      %120 = vmatpush1.bf16.msra.mxu0 %v97
      %121 = vmatprep.subr.bf16.mxu0 0
      %122 = vmatpush2.bf16.msra.mxu0 0
      %123 = vmatprep.subr.bf16.mxu0 0
      %124 = vmatpush2.bf16.msra.mxu0 0
      %125 = vmatprep.subr.bf16.mxu0 0
      %126 = vmatpush2.bf16.msra.mxu0 0
      %127 = vmatprep.subr.bf16.mxu0 0
      %128 = vmatpush2.bf16.msra.mxu0 0
      %129 = vmatprep.subr.bf16.mxu0 0
      %130 = vmatpush2.bf16.msra.mxu0 0
      %131 = vmatprep.subr.bf16.mxu0 0
      %132 = vmatpush2.bf16.msra.mxu0 0
      %133 = vmatprep.subr.bf16.mxu0 0
      %134 = vmatpush2.bf16.msra.mxu0 0
      %135 = vmatprep.subr.bf16.mxu0 0
      %136 = vmatpush2.bf16.msra.mxu0 0
      %137 = vmatprep.mubr.bf16.mxu0 0
      %138 = vmatmul.mubr.bf16.gmra.mxu0 %v103
      %v139 = vpop.f32.mrf.mxu0
      %v140 = vadd.f32 %v79, %v139
      %v141 = vpop.f32.mrf.mxu0
      %v142 = vadd.f32 %v83, %v141
      %v143 = vpop.f32.mrf.mxu0
      %v144 = vadd.f32 %v79, %v143
      %v145 = vpop.f32.mrf.mxu0
      %v146 = vadd.f32 %v83, %v145
      %147 = vdwg.mxu0
      %v148 = vpack.c.bf16 %v140, %v140
      %v149 = vpack.c.bf16 %v144, %v144
      %150 = vst [vmem:[#allocation2] sm:$0xf] %v148
      %151 = vst [vmem:[#allocation2 + $0x4] sm:$0xf] %v149
      %v152 = vpack.c.bf16 %v142, %v142
      %v153 = vpack.c.bf16 %v146, %v146
      %vm154 = vcmask 257024
      %155 = vst.msk [vmem:[#allocation3] sm:$0xf] %vm154, %v152
      %156 = vst.msk [vmem:[#allocation3 + $0x4] sm:$0xf] %vm154, %v153
    $region41: #{tpu_custom_call.1} parent=1 // pred_fallthru
      _
    %s157 = smul.u32 0, 8
    %s158 = sshra.s32 %s157, 3
    %s159 = sand.u32 %s157, 7
    %s160 = smul.addr %s158, 4
    %s161 = scalar_lea.vmem [#allocation4], %s160
    %v162 = vld [vmem:[%s161] sm:$0xf]
    %v163 = vld [vmem:[%s161 + $0x4] sm:$0xf]
    %v164 = vld [vmem:[#allocation7] sm:$0xf]
    %v165 = vld [vmem:[#allocation7 + $0x4] sm:$0xf]
    %v166 = vld [vmem:[%s3] sm:$0x1]
    %v168 = vlaneseq
    %v169 = vshrl.u32 %v168, 7
    %v170 = vsub.s32 0, %v169
    %v171 = vrot.slane %v166, %v170
    %v175 = vunpack.c.l.b16 %v162
    %v176 = vunpack.c.l.b16 %v163
    %v177 = vpack.c.b16 %v176, %v175
    %v180 = vunpack.c.l.b16 %v164
    %v181 = vunpack.c.l.b16 %v165
    %v182 = vpack.c.b16 %v181, %v180
    %vm184 = vcmask 130048
    %v186 = vsel %vm184, %v177, 0
    %188 = vmatprep.subr.bf16.mxu0 0
    %189 = vmatpush1.bf16.msra.mxu0 0
    %190 = vmatprep.subr.bf16.mxu0 0
    %191 = vmatpush1.bf16.msra.mxu0 0
    %192 = vmatprep.subr.bf16.mxu0 0
    %193 = vmatpush1.bf16.msra.mxu0 0
    %194 = vmatprep.subr.bf16.mxu0 0
    %195 = vmatpush1.bf16.msra.mxu0 0
    %196 = vmatprep.subr.bf16.mxu0 0
    %197 = vmatpush1.bf16.msra.mxu0 0
    %198 = vmatprep.subr.bf16.mxu0 0
    %199 = vmatpush1.bf16.msra.mxu0 0
    %200 = vmatprep.subr.bf16.mxu0 0
    %201 = vmatpush1.bf16.msra.mxu0 0
    %202 = vmatprep.subr.bf16.mxu0 0
    %203 = vmatpush1.bf16.msra.mxu0 %v182
    %204 = vmatprep.subr.bf16.mxu0 0
    %205 = vmatpush2.bf16.msra.mxu0 0
    %206 = vmatprep.subr.bf16.mxu0 0
    %207 = vmatpush2.bf16.msra.mxu0 0
    %208 = vmatprep.subr.bf16.mxu0 0
    %209 = vmatpush2.bf16.msra.mxu0 0
    %210 = vmatprep.subr.bf16.mxu0 0
    %211 = vmatpush2.bf16.msra.mxu0 0
    %212 = vmatprep.subr.bf16.mxu0 0
    %213 = vmatpush2.bf16.msra.mxu0 0
    %214 = vmatprep.subr.bf16.mxu0 0
    %215 = vmatpush2.bf16.msra.mxu0 0
    %216 = vmatprep.subr.bf16.mxu0 0
    %217 = vmatpush2.bf16.msra.mxu0 0
    %218 = vmatprep.subr.bf16.mxu0 0
    %219 = vmatpush2.bf16.msra.mxu0 0
    %220 = vmatprep.mubr.bf16.mxu0 0
    %221 = vmatmul.mubr.bf16.gmra.mxu0 %v186
    %v222 = vpop.f32.mrf.mxu0
    %v223 = vadd.f32 %v171, %v222
    %v224 = vpop.f32.mrf.mxu0
    %v225 = vpop.f32.mrf.mxu0
    %v226 = vadd.f32 %v171, %v225
    %v227 = vpop.f32.mrf.mxu0
    %228 = vdwg.mxu0
    %v229 = vpack.c.bf16 %v223, %v223
    %v230 = vpack.c.bf16 %v226, %v226
    %v231 = vld [vmem:[#allocation2] sm:$0xf]
    %v232 = vld [vmem:[#allocation2 + $0x4] sm:$0xf]
    %233 = vmatprep.subr.bf16.mxu0 0
    %234 = vmatpush1.bf16.xpose.msra.mxu0 0
    %235 = vmatprep.subr.bf16.mxu0 0
    %236 = vmatpush1.bf16.xpose.msra.mxu0 0
    %237 = vmatprep.subr.bf16.mxu0 0
    %238 = vmatpush1.bf16.xpose.msra.mxu0 0
    %239 = vmatprep.subr.bf16.mxu0 0
    %240 = vmatpush1.bf16.xpose.msra.mxu0 0
    %241 = vmatprep.subr.bf16.mxu0 0
    %242 = vmatpush1.bf16.xpose.msra.mxu0 0
    %243 = vmatprep.subr.bf16.mxu0 0
    %244 = vmatpush1.bf16.xpose.msra.mxu0 0
    %245 = vmatprep.subr.bf16.mxu0 0
    %246 = vmatpush1.bf16.xpose.msra.mxu0 0
    %247 = vmatprep.subr.bf16.mxu0 0
    %248 = vmatpush1.bf16.xpose.msra.mxu0 %v231
    %249 = vmatprep.subr.bf16.mxu0 0
    %250 = vmatpush2.bf16.xpose.msra.mxu0 0
    %251 = vmatprep.subr.bf16.mxu0 0
    %252 = vmatpush2.bf16.xpose.msra.mxu0 0
    %253 = vmatprep.subr.bf16.mxu0 0
    %254 = vmatpush2.bf16.xpose.msra.mxu0 0
    %255 = vmatprep.subr.bf16.mxu0 0
    %256 = vmatpush2.bf16.xpose.msra.mxu0 0
    %257 = vmatprep.subr.bf16.mxu0 0
    %258 = vmatpush2.bf16.xpose.msra.mxu0 0
    %259 = vmatprep.subr.bf16.mxu0 0
    %260 = vmatpush2.bf16.xpose.msra.mxu0 0
    %261 = vmatprep.subr.bf16.mxu0 0
    %262 = vmatpush2.bf16.xpose.msra.mxu0 0
    %263 = vmatprep.subr.bf16.mxu0 0
    %264 = vmatpush2.bf16.xpose.msra.mxu0 0
    %265 = vmatprep.mubr.bf16.mxu0 0
    %266 = vmatmul.mubr.bf16.gmra.mxu0 %v229
    %v267 = vpop.f32.mrf.mxu0
    %v268 = vadd.f32 0.0, %v267
    %v269 = vpop.f32.mrf.mxu0
    %v270 = vpop.f32.mrf.mxu0
    %v271 = vpop.f32.mrf.mxu0
    %272 = vdwg.mxu0
    %273 = vmatprep.subr.bf16.mxu0 0
    %274 = vmatpush1.bf16.xpose.msra.mxu0 0
    %275 = vmatprep.subr.bf16.mxu0 0
    %276 = vmatpush1.bf16.xpose.msra.mxu0 0
    %277 = vmatprep.subr.bf16.mxu0 0
    %278 = vmatpush1.bf16.xpose.msra.mxu0 0
    %279 = vmatprep.subr.bf16.mxu0 0
    %280 = vmatpush1.bf16.xpose.msra.mxu0 0
    %281 = vmatprep.subr.bf16.mxu0 0
    %282 = vmatpush1.bf16.xpose.msra.mxu0 0
    %283 = vmatprep.subr.bf16.mxu0 0
    %284 = vmatpush1.bf16.xpose.msra.mxu0 0
    %285 = vmatprep.subr.bf16.mxu0 0
    %286 = vmatpush1.bf16.xpose.msra.mxu0 0
    %287 = vmatprep.subr.bf16.mxu0 0
    %288 = vmatpush1.bf16.xpose.msra.mxu0 %v232
    %289 = vmatprep.subr.bf16.mxu0 0
    %290 = vmatpush2.bf16.xpose.msra.mxu0 0
    %291 = vmatprep.subr.bf16.mxu0 0
    %292 = vmatpush2.bf16.xpose.msra.mxu0 0
    %293 = vmatprep.subr.bf16.mxu0 0
    %294 = vmatpush2.bf16.xpose.msra.mxu0 0
    %295 = vmatprep.subr.bf16.mxu0 0
    %296 = vmatpush2.bf16.xpose.msra.mxu0 0
    %297 = vmatprep.subr.bf16.mxu0 0
    %298 = vmatpush2.bf16.xpose.msra.mxu0 0
    %299 = vmatprep.subr.bf16.mxu0 0
    %300 = vmatpush2.bf16.xpose.msra.mxu0 0
    %301 = vmatprep.subr.bf16.mxu0 0
    %302 = vmatpush2.bf16.xpose.msra.mxu0 0
    %303 = vmatprep.subr.bf16.mxu0 0
    %304 = vmatpush2.bf16.xpose.msra.mxu0 0
    %305 = vmatprep.mubr.bf16.mxu0 0
    %306 = vmatmul.mubr.bf16.gmra.mxu0 %v230
    %v307 = vpop.f32.mrf.mxu0
    %v308 = vadd.f32 0.0, %v307
    %v309 = vpop.f32.mrf.mxu0
    %v310 = vpop.f32.mrf.mxu0
    %v311 = vpop.f32.mrf.mxu0
    %312 = vdwg.mxu0
    %v313 = vlaneseq
    %v314 = vand.u32 %v313, 127
    %v315 = vld [vmem:[%s1] sm:$0x1]
    %v316 = vld [vmem:[%s1 + $0x1] sm:$0x1]
    %317 = vset.pattern.permute.xlu0 0
    %318 = vperm.xlu0 %317, %v315
    %v319 = vpop.permute.xlu0 %318
    %v320 = vlaneseq
    %v321 = vshrl.u32 %v320, 7
    %v322 = vsub.s32 0, %v321
    %v323 = vrot.slane %v319, %v322
    %324 = vset.pattern.permute.xlu0 0
    %325 = vperm.xlu0 %324, %v316
    %v326 = vpop.permute.xlu0 %325
    %v327 = vlaneseq
    %v328 = vshrl.u32 %v327, 7
    %v329 = vsub.s32 0, %v328
    %v330 = vrot.slane %v326, %v329
    %vm331 = vcmp.ge.s32.totalorder %v314, %v323
    %vm332 = vcmp.ge.s32.totalorder %v314, %v330
    %v333 = vsel %vm331, 1, 0
    %v334 = vsel %vm332, 1, 0
    %vm335 = vcmp.eq.s32.totalorder %v333, 1
    %vm336 = vcmp.eq.s32.totalorder %v334, 1
    %v337 = vsel %vm335, -1000000.0, %v268
    %v338 = vsel %vm336, -1000000.0, %v308
    %vm339 = vcmask 64512
    %v340 = vsel %vm339, %v337, -inf
    %341 = vmax.xlane.f32.xlu0 %v340
    %v342 = vpop.xlane.xlu0 %341
    %v343 = vsel %vm339, %v338, -inf
    %344 = vmax.xlane.f32.xlu0 %v343
    %v345 = vpop.xlane.xlu0 %344
    %v346 = vsub.f32 %v337, %v342
    %v347 = vsub.f32 %v338, %v345
    %v348 = vmul.f32 %v346, 1.442695
    %v349 = vpow.pop %v348
    %v350 = vmul.f32 %v347, 1.442695
    %v351 = vpow.pop %v350
    %v352 = vsel %vm339, %v349, 0.0
    %353 = vadd.xlane.f32.xlu0 %v352
    %v354 = vpop.xlane.xlu0 %353
    %v355 = vsel %vm339, %v351, 0.0
    %356 = vadd.xlane.f32.xlu0 %v355
    %v357 = vpop.xlane.xlu0 %356
    %v358 = vpack.c.bf16 %v349, %v349
    %v359 = vpack.c.bf16 %v351, %v351
    %v360 = vld [vmem:[#allocation3] sm:$0xf]
    %v361 = vld [vmem:[#allocation3 + $0x4] sm:$0xf]
    %v363 = vsel %vm339, %v358, 0
    %vm365 = vcmask 1043456
    %v367 = vsel %vm365, %v360, 0
    %369 = vmatprep.subr.bf16.mxu0 0
    %370 = vmatpush1.bf16.msra.mxu0 0
    %371 = vmatprep.subr.bf16.mxu0 0
    %372 = vmatpush1.bf16.msra.mxu0 0
    %373 = vmatprep.subr.bf16.mxu0 0
    %374 = vmatpush1.bf16.msra.mxu0 0
    %375 = vmatprep.subr.bf16.mxu0 0
    %376 = vmatpush1.bf16.msra.mxu0 0
    %377 = vmatprep.subr.bf16.mxu0 0
    %378 = vmatpush1.bf16.msra.mxu0 0
    %379 = vmatprep.subr.bf16.mxu0 0
    %380 = vmatpush1.bf16.msra.mxu0 0
    %381 = vmatprep.subr.bf16.mxu0 0
    %382 = vmatpush1.bf16.msra.mxu0 0
    %383 = vmatprep.subr.bf16.mxu0 0
    %384 = vmatpush1.bf16.msra.mxu0 %v367
    %385 = vmatprep.subr.bf16.mxu0 0
    %386 = vmatpush2.bf16.msra.mxu0 0
    %387 = vmatprep.subr.bf16.mxu0 0
    %388 = vmatpush2.bf16.msra.mxu0 0
    %389 = vmatprep.subr.bf16.mxu0 0
    %390 = vmatpush2.bf16.msra.mxu0 0
    %391 = vmatprep.subr.bf16.mxu0 0
    %392 = vmatpush2.bf16.msra.mxu0 0
    %393 = vmatprep.subr.bf16.mxu0 0
    %394 = vmatpush2.bf16.msra.mxu0 0
    %395 = vmatprep.subr.bf16.mxu0 0
    %396 = vmatpush2.bf16.msra.mxu0 0
    %397 = vmatprep.subr.bf16.mxu0 0
    %398 = vmatpush2.bf16.msra.mxu0 0
    %399 = vmatprep.subr.bf16.mxu0 0
    %400 = vmatpush2.bf16.msra.mxu0 0
    %401 = vmatprep.mubr.bf16.mxu0 0
    %402 = vmatmul.mubr.bf16.gmra.mxu0 %v363
    %v403 = vpop.f32.mrf.mxu0
    %v404 = vadd.f32 0.0, %v403
    %v405 = vpop.f32.mrf.mxu0
    %v406 = vpop.f32.mrf.mxu0
    %v407 = vpop.f32.mrf.mxu0
    %408 = vdwg.mxu0
    %v410 = vsel %vm339, %v359, 0
    %v413 = vsel %vm365, %v361, 0
    %415 = vmatprep.subr.bf16.mxu0 0
    %416 = vmatpush1.bf16.msra.mxu0 0
    %417 = vmatprep.subr.bf16.mxu0 0
    %418 = vmatpush1.bf16.msra.mxu0 0
    %419 = vmatprep.subr.bf16.mxu0 0
    %420 = vmatpush1.bf16.msra.mxu0 0
    %421 = vmatprep.subr.bf16.mxu0 0
    %422 = vmatpush1.bf16.msra.mxu0 0
    %423 = vmatprep.subr.bf16.mxu0 0
    %424 = vmatpush1.bf16.msra.mxu0 0
    %425 = vmatprep.subr.bf16.mxu0 0
    %426 = vmatpush1.bf16.msra.mxu0 0
    %427 = vmatprep.subr.bf16.mxu0 0
    %428 = vmatpush1.bf16.msra.mxu0 0
    %429 = vmatprep.subr.bf16.mxu0 0
    %430 = vmatpush1.bf16.msra.mxu0 %v413
    %431 = vmatprep.subr.bf16.mxu0 0
    %432 = vmatpush2.bf16.msra.mxu0 0
    %433 = vmatprep.subr.bf16.mxu0 0
    %434 = vmatpush2.bf16.msra.mxu0 0
    %435 = vmatprep.subr.bf16.mxu0 0
    %436 = vmatpush2.bf16.msra.mxu0 0
    %437 = vmatprep.subr.bf16.mxu0 0
    %438 = vmatpush2.bf16.msra.mxu0 0
    %439 = vmatprep.subr.bf16.mxu0 0
    %440 = vmatpush2.bf16.msra.mxu0 0
    %441 = vmatprep.subr.bf16.mxu0 0
    %442 = vmatpush2.bf16.msra.mxu0 0
    %443 = vmatprep.subr.bf16.mxu0 0
    %444 = vmatpush2.bf16.msra.mxu0 0
    %445 = vmatprep.subr.bf16.mxu0 0
    %446 = vmatpush2.bf16.msra.mxu0 0
    %447 = vmatprep.mubr.bf16.mxu0 0
    %448 = vmatmul.mubr.bf16.gmra.mxu0 %v410
    %v449 = vpop.f32.mrf.mxu0
    %v450 = vadd.f32 0.0, %v449
    %v451 = vpop.f32.mrf.mxu0
    %v452 = vpop.f32.mrf.mxu0
    %v453 = vpop.f32.mrf.mxu0
    %454 = vdwg.mxu0
    %v455 = vrcp.pop %v354
    %v456 = vrcp.pop %v357
    %v457 = vmul.f32 %v404, %v455
    %v458 = vmul.f32 %v450, %v456
    %vm459 = vcmask 261120
    %460 = vst.msk [vmem:[#allocation10] sm:$0xff] %vm459, %v457
    %461 = vst.msk [vmem:[#allocation10 + $0x8] sm:$0xff] %vm459, %v458
    // Predicated region
    $region42: #{tpu_custom_call.1} parent=1 // pred_check
      _
    $region43: #{tpu_custom_call.1} parent=1 // pred_check_branch
      %463 = sbr.rel (0) target = $region45
    $region44: #{tpu_custom_call.1} parent=1 // pred_region
      %s465 = ssub.s32 256, 256
      %466 = vsyncadd [#allocation6], %s465
      %s467 = sshll.u32 [#allocation10], 4
      %s468 = int_to_ptr.vmem [resolvable:$true] %s467
      %473 = dma.vmem_to_hbm [thread:$0]  %s468, 256, %s6, [#allocation6], 128, 128, 8
    $region45: #{tpu_custom_call.1} parent=1 // pred_fallthru
      _
    // Predicated region
    $region46: #{tpu_custom_call.1} parent=1 // pred_check
      _
    $region47: #{tpu_custom_call.1} parent=1 // pred_check_branch
      %475 = sbr.rel (0) target = $region49
    $region48: #{tpu_custom_call.1} parent=1 // pred_region
      %476 = dma.done [#allocation6], 256
    $region49: #{tpu_custom_call.1} parent=1 // pred_fallthru
      _
    %477 = vsyncpa [#allocation5], 1
    %478 = vsyncpa [#allocation8], 1
    %479 = vsyncpa [#allocation6], 1

</llo_original>
